<compile_context>
chip_gen: v7x
topology: tpu7x:2x2x1
jax: 0.10.0
libtpu: 0.0.40
codegen_flags: <defaults>
</compile_context>

<pallas_src>
import jax
import jax.numpy as jnp
from jax.experimental import pallas as pl
from jax.experimental.pallas import tpu as pltpu

ALPHA = 0.65
GAMMA = 2.0            # implemented as an explicit square below
_LOG_CLAMP = -100.0    # PyTorch binary_cross_entropy clamps log terms at -100

LANES = 128
NUM_SLICES = 2                 # leading "parallel" grid axis (helps v7x, harmless on 1-TC chips)
_DEFAULT_MAX_TILE_ROWS = 2048  # (2048,128) f32 = 1 MiB per input block


def _focal_loss_kernel(p_ref, t_ref, o_ref):
    i = pl.program_id(1)

    @pl.when(i == 0)
    def _():
        o_ref[...] = jnp.zeros_like(o_ref)

    p = p_ref[...].astype(jnp.float32)
    t = t_ref[...].astype(jnp.float32)

    # binary_cross_entropy (reduction='none') with PyTorch's log clamp
    ln_p = jnp.maximum(jnp.log(p), _LOG_CLAMP)
    ln_1mp = jnp.maximum(jnp.log(1.0 - p), _LOG_CLAMP)
    bce = -(t * ln_p + (1.0 - t) * ln_1mp)

    pt = jnp.exp(-bce)
    w = 1.0 - pt
    # gamma == 2 -> explicit square (avoids pow -> exp/log on the single EUP slot)
    f_loss = ALPHA * (w * w) * bce

    # Vector accumulation: collapse the row axis onto the (8,128) vreg tile with
    # cheap VPU adds; defer the cross-lane reduce to the wrapper.
    tile_rows = f_loss.shape[0]
    partial = f_loss.reshape(tile_rows // 8, 8, LANES).sum(axis=0)
    o_ref[...] += partial.reshape(o_ref.shape)


def focal_loss(inputs, targets, *, max_tile_rows=_DEFAULT_MAX_TILE_ROWS):
    """inputs, targets: same shape (probabilities, logits=False). Returns scalar mean focal loss."""
    assert inputs.shape == targets.shape
    n_elem = inputs.size

    p_flat = inputs.reshape(-1).astype(jnp.float32)
    t_flat = targets.reshape(-1).astype(jnp.float32)

    rows_min = pl.cdiv(n_elem, LANES)

    # Tile rows: multiple of 8, capped at max_tile_rows, sized so tiny inputs don't over-pad.
    tile = min(max_tile_rows, pl.cdiv(rows_min, NUM_SLICES))
    tile = max(8, ((tile + 7) // 8) * 8)

    chunk = NUM_SLICES * tile
    rows_padded = pl.cdiv(rows_min, chunk) * chunk
    n_padded = rows_padded * LANES

    pad = n_padded - n_elem
    if pad:
        # p=1, t=1 contributes exactly 0 (bce=0, (1-pt)^2=0) -> no masking needed.
        p_flat = jnp.concatenate([p_flat, jnp.ones((pad,), jnp.float32)])
        t_flat = jnp.concatenate([t_flat, jnp.ones((pad,), jnp.float32)])

    p2d = p_flat.reshape(rows_padded, LANES)
    t2d = t_flat.reshape(rows_padded, LANES)

    inner = rows_padded // chunk  # grid steps per slice

    partials = pl.pallas_call(
        _focal_loss_kernel,
        out_shape=jax.ShapeDtypeStruct((NUM_SLICES, 8, LANES), jnp.float32),
        grid_spec=pltpu.PrefetchScalarGridSpec(
            num_scalar_prefetch=0,
            grid=(NUM_SLICES, inner),
            in_specs=[
                pl.BlockSpec((tile, LANES), lambda c, i: (c * inner + i, 0)),
                pl.BlockSpec((tile, LANES), lambda c, i: (c * inner + i, 0)),
            ],
            out_specs=pl.BlockSpec((1, 8, LANES), lambda c, i: (c, 0, 0)),
        ),
        compiler_params=pltpu.CompilerParams(
            dimension_semantics=("parallel", "arbitrary"),
        ),
    )(p2d, t2d)

    # Final (tiny) cross-lane reduce + mean over the ORIGINAL element count.
    return (jnp.sum(partials) / jnp.float32(n_elem)).astype(jnp.float32)


def focal_loss_ref(inputs, targets):
    p = inputs.astype(jnp.float32)
    t = targets.astype(jnp.float32)
    ln_p = jnp.maximum(jnp.log(p), _LOG_CLAMP)
    ln_1mp = jnp.maximum(jnp.log(1.0 - p), _LOG_CLAMP)
    bce = -(t * ln_p + (1.0 - t) * ln_1mp)
    pt = jnp.exp(-bce)
    return jnp.mean(ALPHA * (1.0 - pt) ** GAMMA * bce)


if __name__ == "__main__":
    key = jax.random.PRNGKey(0)
    k1, k2 = jax.random.split(key)
    # NCHW-shaped example: batch=2, channels=4, spatial=16x16
    shape = (2, 4, 16, 16)
    # inputs are probabilities (logits=False); keep strictly inside (0, 1)
    inputs = jax.random.uniform(k1, shape, dtype=jnp.float32, minval=1e-4, maxval=1.0 - 1e-4)
    targets = (jax.random.uniform(k2, shape, dtype=jnp.float32) > 0.5).astype(jnp.float32)

    out = focal_loss(inputs, targets)
    out = jax.block_until_ready(out)

    ref = focal_loss_ref(inputs, targets)
    assert jnp.allclose(out, ref, rtol=1e-5, atol=1e-6), (out, ref)
    print("KERNEL_OK")
</pallas_src>

<mosaic_0001>
module attributes {stable_mosaic.version = 11 : i64} {
  func.func @_focal_loss_kernel(%arg0: i32, %arg1: i32, %arg2: memref<8x128xf32, #tpu.memory_space<vmem>>, %arg3: memref<8x128xf32, #tpu.memory_space<vmem>>, %arg4: memref<1x8x128xf32, #tpu.memory_space<vmem>>) attributes {dimension_semantics = [#tpu.dimension_semantics<parallel>, #tpu.dimension_semantics<arbitrary>], iteration_bounds = array<i64: 2, 1>, scalar_prefetch = 0 : i64, scratch_operands = 0 : i64, tpu.core_type = #tpu.core_type<tc>, window_params = [{transform_indices = @transform_0, window_bounds = array<i64: 8, 128>}, {transform_indices = @transform_1, window_bounds = array<i64: 8, 128>}, {transform_indices = @transform_2, window_bounds = array<i64: 1, 8, 128>}]} {
    %c0_i32 = arith.constant 0 : i32
    %0 = arith.cmpi eq, %arg1, %c0_i32 : i32
    %1 = arith.extui %0 : i1 to i32
    %c0_i32_0 = arith.constant 0 : i32
    %2 = arith.cmpi ne, %1, %c0_i32_0 : i32
    scf.if %2 {
      %cst_18 = arith.constant 0.000000e+00 : f32
      %35 = vector.broadcast %cst_18 : f32 to vector<1x8x128xf32>
      %c0_19 = arith.constant 0 : index
      %c0_20 = arith.constant 0 : index
      %c0_21 = arith.constant 0 : index
      %36 = vector.load %arg4[%c0_19, %c0_20, %c0_21] : memref<1x8x128xf32, #tpu.memory_space<vmem>>, vector<1x8x128xf32>
      tpu.vector_store %arg4[%c0_19, %c0_20, %c0_21], %35 {strides = array<i32>} : memref<1x8x128xf32, #tpu.memory_space<vmem>>, vector<1x8x128xf32>,
    } else {
    }
    %c0 = arith.constant 0 : index
    %c0_1 = arith.constant 0 : index
    %3 = vector.load %arg2[%c0, %c0_1] : memref<8x128xf32, #tpu.memory_space<vmem>>, vector<8x128xf32>
    %c0_2 = arith.constant 0 : index
    %c0_3 = arith.constant 0 : index
    %4 = vector.load %arg3[%c0_2, %c0_3] : memref<8x128xf32, #tpu.memory_space<vmem>>, vector<8x128xf32>
    %5 = math.log %3 : vector<8x128xf32>
    %cst = arith.constant -1.000000e+02 : f32
    %6 = vector.broadcast %cst : f32 to vector<8x128xf32>
    %7 = arith.maximumf %5, %6 : vector<8x128xf32>
    %cst_4 = arith.constant 1.000000e+00 : f32
    %8 = vector.broadcast %cst_4 : f32 to vector<8x128xf32>
    %9 = arith.subf %8, %3 : vector<8x128xf32>
    %10 = math.log %9 : vector<8x128xf32>
    %cst_5 = arith.constant -1.000000e+02 : f32
    %11 = vector.broadcast %cst_5 : f32 to vector<8x128xf32>
    %12 = arith.maximumf %10, %11 : vector<8x128xf32>
    %13 = arith.mulf %4, %7 : vector<8x128xf32>
    %cst_6 = arith.constant 1.000000e+00 : f32
    %14 = vector.broadcast %cst_6 : f32 to vector<8x128xf32>
    %15 = arith.subf %14, %4 : vector<8x128xf32>
    %16 = arith.mulf %15, %12 : vector<8x128xf32>
    %17 = arith.addf %13, %16 : vector<8x128xf32>
    %cst_7 = arith.constant 0.000000e+00 : f32
    %18 = vector.broadcast %cst_7 : f32 to vector<8x128xf32>
    %19 = arith.subf %18, %17 : vector<8x128xf32>
    %cst_8 = arith.constant 0.000000e+00 : f32
    %20 = vector.broadcast %cst_8 : f32 to vector<8x128xf32>
    %21 = arith.subf %20, %19 : vector<8x128xf32>
    %22 = math.exp %21 : vector<8x128xf32>
    %cst_9 = arith.constant 1.000000e+00 : f32
    %23 = vector.broadcast %cst_9 : f32 to vector<8x128xf32>
    %24 = arith.subf %23, %22 : vector<8x128xf32>
    %25 = arith.mulf %24, %24 : vector<8x128xf32>
    %cst_10 = arith.constant 6.500000e-01 : f32
    %26 = vector.broadcast %cst_10 : f32 to vector<8x128xf32>
    %27 = arith.mulf %26, %25 : vector<8x128xf32>
    %28 = arith.mulf %27, %19 : vector<8x128xf32>
    %29 = vector.shape_cast %28 : vector<8x128xf32> to vector<1x8x128xf32>
    %cst_11 = arith.constant dense<0.000000e+00> : vector<8x128xf32>
    %30 = vector.multi_reduction <add>, %29, %cst_11 [0] : vector<1x8x128xf32> to vector<8x128xf32>
    %c0_12 = arith.constant 0 : index
    %c0_13 = arith.constant 0 : index
    %c0_14 = arith.constant 0 : index
    %31 = vector.load %arg4[%c0_12, %c0_13, %c0_14] : memref<1x8x128xf32, #tpu.memory_space<vmem>>, vector<1x8x128xf32>
    %32 = vector.shape_cast %30 : vector<8x128xf32> to vector<1x8x128xf32>
    %33 = arith.addf %31, %32 : vector<1x8x128xf32>
    %c0_15 = arith.constant 0 : index
    %c0_16 = arith.constant 0 : index
    %c0_17 = arith.constant 0 : index
    %34 = vector.load %arg4[%c0_15, %c0_16, %c0_17] : memref<1x8x128xf32, #tpu.memory_space<vmem>>, vector<1x8x128xf32>
    tpu.vector_store %arg4[%c0_15, %c0_16, %c0_17], %33 {strides = array<i32>} : memref<1x8x128xf32, #tpu.memory_space<vmem>>, vector<1x8x128xf32>,
    return
  }
  func.func @transform_0(%arg0: i32, %arg1: i32) -> (i32, i32) {
    %c1_i32 = arith.constant 1 : i32
    %0 = arith.muli %arg0, %c1_i32 : i32
    %1 = arith.addi %0, %arg1 : i32
    %c0_i32 = arith.constant 0 : i32
    %c0_i32_0 = arith.constant 0 : i32
    return %1, %c0_i32 : i32, i32
  }
  func.func @transform_1(%arg0: i32, %arg1: i32) -> (i32, i32) {
    %c1_i32 = arith.constant 1 : i32
    %0 = arith.muli %arg0, %c1_i32 : i32
    %1 = arith.addi %0, %arg1 : i32
    %c0_i32 = arith.constant 0 : i32
    %c0_i32_0 = arith.constant 0 : i32
    return %1, %c0_i32 : i32, i32
  }
  func.func @transform_2(%arg0: i32, %arg1: i32) -> (i32, i32, i32) {
    %c0_i32 = arith.constant 0 : i32
    %c0_i32_0 = arith.constant 0 : i32
    %c0_i32_1 = arith.constant 0 : i32
    return %arg0, %c0_i32, %c0_i32_0 : i32, i32, i32
  }
}

</mosaic_0001>

<llo_original>
// kernel: tpu_custom_call.1
$region0: #{tpu_custom_call.1}
  #allocation0 [shape = 'u32[]', space=smem, size = 0x4, offset = 0x4, fixed_abs, tag = 'smem constant byte address 0x4 - core index']
  #allocation1 [shape = 'u32[144,128]{1,0:T(1,128)}', space=vmem, size = 0x12000, scoped, tag = 'internal scratch']
  %s0 = inlined_call_operand.hbm [shape: f32[16,128], index: 0, kind: input, shape index: {}]
  %s1 = inlined_call_operand.hbm [shape: f32[16,128], index: 1, kind: input, shape index: {}]
  %s2 = inlined_call_operand.hbm [shape: f32[2,8,128], index: 2, kind: output, shape index: {}]
  %s3 = sld [smem:[#allocation0]]
  $region53: #{tpu_custom_call.1} parent=0
    _
  %s5 = ssub.s32 1, %s3
  %s6 = scalar_select 0, %s5, %s3
  $region1: #{tpu_custom_call.1} parent=0
    #allocation2 [shape = 'u8[8192]{0}', space=vmem, size = 0x2000, scoped, tag = 'input window, operand 0']
    #allocation3 [shape = 's32[2]{0}', space=sflag, size = 0x8, scoped, tag = 'scoped memory for tpu_custom_call.1']
    #allocation4 [shape = 's32[2]{0}', space=sflag, size = 0x8, scoped, tag = 'scoped memory for tpu_custom_call.1']
    #allocation5 [shape = 'u8[8192]{0}', space=vmem, size = 0x2000, scoped, tag = 'input window, operand 1']
    #allocation6 [shape = 's32[2]{0}', space=sflag, size = 0x8, scoped, tag = 'scoped memory for tpu_custom_call.1']
    #allocation7 [shape = 'u8[8192]{0}', space=vmem, size = 0x2000, scoped, tag = 'output window, operand 0']
    %7 = vsyncpa [#allocation3], 0
    %s8 = scalar_lea.sflag [#allocation3], 1
    %9 = vsyncpa %s8, 0
    %10 = vsyncpa [#allocation6], 0
    %s11 = scalar_lea.sflag [#allocation6], 1
    %12 = vsyncpa %s11, 0
    %13 = vsyncpa [#allocation4], 0
    %s14 = scalar_lea.sflag [#allocation4], 1
    %15 = vsyncpa %s14, 0
    loop: start=0, step=1, limit=4
    $region2: #{tpu_custom_call.1} parent=1 // loop_pre_header
      _
    $region3: #{tpu_custom_call.1} parent=1 // loop_header
      %s17 = sphi 0, %s21
      %p18 = scmp.ge.s32.totalorder %s17, 4
      %s24 = sphi 0, %s36
      %s25 = sphi 0, %s32
      %s26 = sphi 0, %s24
      %s27 = sphi 0, %s25
      %s28 = sphi 0, %s26
      %s29 = sphi 0, %s27
      %s41 = sphi 0, %s43
      %s44 = sphi 0, %s41
      %s45 = sphi 0, %s44
      %s61 = sphi 0, %s45
      %s69 = sphi 0, %s71
      %s72 = sphi 0, %s69
      %s73 = sphi 0, %s72
      %s89 = sphi 0, %s73
      %s95 = sphi 0, %s97
      %s98 = sphi 0, %s95
      %s99 = sphi 0, %s98
      %s115 = sphi 0, %s99
    $region4: #{tpu_custom_call.1} parent=1 // loop_header_branch
      %20 = sbr.rel (%p18) target = $region8
    $region5: #{tpu_custom_call.1} parent=1 // loop_body
      %s22 = ssub.s32 %s17, 1
      %s23 = ssub.s32 %s17, 2
      %s30 = sadd.s32 1, %s25
      %p31 = scmp.ge.s32.totalorder %s30, 1
      %s32 = scalar_select %p31, 0, %s30
      %s33 = sadd.s32 1, %s24
      %s34 = scalar_select %p31, %s33, %s24
      %p35 = scmp.ge.s32.totalorder %s34, 2
      %s36 = scalar_select %p35, 0, %s34
      %s37 = sadd.s32 %s24, %s25
      %s38 = sadd.s32 %s36, %s32
      %s39 = ssub.s32 %s37, %s38
      %p40 = scmp.eq.s32.totalorder %s39, 0
      %s42 = sadd.s32 %s41, 1
      %s43 = scalar_select %p40, %s41, %s42
      %p46 = pneg %p40
      %p47 = scmp.eq.s32.totalorder %s17, 1
      %p48 = por %p46, %p47
      %p49 = scmp.ne.s32.totalorder %s41, %s44
      %p50 = scmp.eq.s32.totalorder %s17, 0
      %p51 = por %p49, %p50
      %p52 = scmp.ne.s32.totalorder %s41, %s44
      %p53 = scmp.eq.s32.totalorder %s22, 1
      %p54 = por %p52, %p53
      %p55 = scmp.ne.s32.totalorder %s44, %s45
      %p56 = scmp.eq.s32.totalorder %s22, 0
      %p57 = por %p55, %p56
      %p58 = scmp.ne.s32.totalorder %s44, %s45
      %p59 = scmp.eq.s32.totalorder %s23, 1
      %p60 = por %p58, %p59
      %p62 = scmp.ne.s32.totalorder %s45, %s61
      %p63 = scmp.eq.s32.totalorder %s23, 0
      %p64 = por %p62, %p63
      %s65 = sadd.s32 %s24, %s25
      %s66 = sadd.s32 %s36, %s32
      %s67 = ssub.s32 %s65, %s66
      %p68 = scmp.eq.s32.totalorder %s67, 0
      %s70 = sadd.s32 %s69, 1
      %s71 = scalar_select %p68, %s69, %s70
      %p74 = pneg %p68
      %p75 = scmp.eq.s32.totalorder %s17, 1
      %p76 = por %p74, %p75
      %p77 = scmp.ne.s32.totalorder %s69, %s72
      %p78 = scmp.eq.s32.totalorder %s17, 0
      %p79 = por %p77, %p78
      %p80 = scmp.ne.s32.totalorder %s69, %s72
      %p81 = scmp.eq.s32.totalorder %s22, 1
      %p82 = por %p80, %p81
      %p83 = scmp.ne.s32.totalorder %s72, %s73
      %p84 = scmp.eq.s32.totalorder %s22, 0
      %p85 = por %p83, %p84
      %p86 = scmp.ne.s32.totalorder %s72, %s73
      %p87 = scmp.eq.s32.totalorder %s23, 1
      %p88 = por %p86, %p87
      %p90 = scmp.ne.s32.totalorder %s73, %s89
      %p91 = scmp.eq.s32.totalorder %s23, 0
      %p92 = por %p90, %p91
      %s93 = ssub.s32 %s24, %s36
      %p94 = scmp.eq.s32.totalorder %s93, 0
      %s96 = sadd.s32 %s95, 1
      %s97 = scalar_select %p94, %s95, %s96
      %p100 = pneg %p94
      %p101 = scmp.eq.s32.totalorder %s17, 1
      %p102 = por %p100, %p101
      %p103 = scmp.ne.s32.totalorder %s95, %s98
      %p104 = scmp.eq.s32.totalorder %s17, 0
      %p105 = por %p103, %p104
      %p106 = scmp.ne.s32.totalorder %s95, %s98
      %p107 = scmp.eq.s32.totalorder %s22, 1
      %p108 = por %p106, %p107
      %p109 = scmp.ne.s32.totalorder %s98, %s99
      %p110 = scmp.eq.s32.totalorder %s22, 0
      %p111 = por %p109, %p110
      %p112 = scmp.ne.s32.totalorder %s98, %s99
      %p113 = scmp.eq.s32.totalorder %s23, 1
      %p114 = por %p112, %p113
      %p116 = scmp.ne.s32.totalorder %s99, %s115
      %p117 = scmp.eq.s32.totalorder %s23, 0
      %p118 = por %p116, %p117
      %p119 = scmp.le.s32.totalorder 1, %s17
      %p120 = scmp.lt.s32.totalorder %s17, 3
      %p121 = pnand %p119, %p120
      %p122 = pneg %p121
      // Predicated region
      $region9: #{tpu_custom_call.1} parent=5 // pred_check
        _
      $region10: #{tpu_custom_call.1} parent=5 // pred_check_branch
        %124 = sbr.rel (%p121) target = $region12
      $region11: #{tpu_custom_call.1} parent=5 // pred_region
        %s125 = ssub.s32 %s17, 1
      $region12: #{tpu_custom_call.1} parent=5 // pred_fallthru
        _
      %p126 = scmp.lt.s32.totalorder %s17, 2
      // Predicated region
      $region13: #{tpu_custom_call.1} parent=5 // pred_check
        %p127 = pneg %p126
      $region14: #{tpu_custom_call.1} parent=5 // pred_check_branch
        %129 = sbr.rel (%p127) target = $region16
      $region15: #{tpu_custom_call.1} parent=5 // pred_region
        // Predicated region
        $region17: #{tpu_custom_call.1} parent=15 // pred_check
          %p130 = pneg %p51
        $region18: #{tpu_custom_call.1} parent=15 // pred_check_branch
          %132 = sbr.rel (%p130) target = $region20
        $region19: #{tpu_custom_call.1} parent=15 // pred_region
          %s133 = sand.u32 %s41, 1
          %s134 = scalar_lea.sflag [#allocation3], %s133
          %s135 = sand.u32 %s41, 1
          %s136 = smul.addr %s135, 8
          %s137 = scalar_lea.vmem [#allocation2], %s136
          %s138 = sadd.s32 %s24, %s25
          %s140 = ssub.s32 128, 128
          %141 = vsyncadd %s134, %s140
          %s142 = smul.addr %s138, 128
          %s143 = scalar_lea.hbm %s0, %s142
          %s145 = sshll.u32 %s137, 4
          %s146 = int_to_ptr.vmem [resolvable:$true] %s145
          %148 = dma.hbm_to_vmem [thread:$0]  %s143, 128, %s146, %s134
        $region20: #{tpu_custom_call.1} parent=15 // pred_fallthru
          _
        // Predicated region
        $region21: #{tpu_custom_call.1} parent=15 // pred_check
          %p149 = pneg %p79
        $region22: #{tpu_custom_call.1} parent=15 // pred_check_branch
          %151 = sbr.rel (%p149) target = $region24
        $region23: #{tpu_custom_call.1} parent=15 // pred_region
          %s152 = sand.u32 %s69, 1
          %s153 = scalar_lea.sflag [#allocation6], %s152
          %s154 = sand.u32 %s69, 1
          %s155 = smul.addr %s154, 8
          %s156 = scalar_lea.vmem [#allocation5], %s155
          %s157 = sadd.s32 %s24, %s25
          %s159 = ssub.s32 128, 128
          %160 = vsyncadd %s153, %s159
          %s161 = smul.addr %s157, 128
          %s162 = scalar_lea.hbm %s1, %s161
          %s164 = sshll.u32 %s156, 4
          %s165 = int_to_ptr.vmem [resolvable:$true] %s164
          %167 = dma.hbm_to_vmem [thread:$0]  %s162, 128, %s165, %s153
        $region24: #{tpu_custom_call.1} parent=15 // pred_fallthru
          _
      $region16: #{tpu_custom_call.1} parent=5 // pred_fallthru
        _
      %p168 = scmp.le.s32.totalorder 1, %s17
      %p169 = scmp.lt.s32.totalorder %s17, 3
      %p170 = pnand %p168, %p169
      %p171 = pneg %p170
      // Predicated region
      $region25: #{tpu_custom_call.1} parent=5 // pred_check
        _
      $region26: #{tpu_custom_call.1} parent=5 // pred_check_branch
        %173 = sbr.rel (%p170) target = $region28
      $region27: #{tpu_custom_call.1} parent=5 // pred_region
        %s174 = ssub.s32 %s17, 1
        %s175 = sand.u32 %s44, 1
        %s176 = scalar_lea.sflag [#allocation3], %s175
        %s177 = sand.u32 %s44, 1
        %s178 = smul.addr %s177, 8
        %s179 = scalar_lea.vmem [#allocation2], %s178
        // Predicated region
        $region29: #{tpu_custom_call.1} parent=27 // pred_check
          %p180 = pneg %p57
        $region30: #{tpu_custom_call.1} parent=27 // pred_check_branch
          %182 = sbr.rel (%p180) target = $region32
        $region31: #{tpu_custom_call.1} parent=27 // pred_region
          %183 = dma.done %s176, 128
        $region32: #{tpu_custom_call.1} parent=27 // pred_fallthru
          _
        %s184 = sand.u32 %s72, 1
        %s185 = scalar_lea.sflag [#allocation6], %s184
        %s186 = sand.u32 %s72, 1
        %s187 = smul.addr %s186, 8
        %s188 = scalar_lea.vmem [#allocation5], %s187
        // Predicated region
        $region33: #{tpu_custom_call.1} parent=27 // pred_check
          %p189 = pneg %p85
        $region34: #{tpu_custom_call.1} parent=27 // pred_check_branch
          %191 = sbr.rel (%p189) target = $region36
        $region35: #{tpu_custom_call.1} parent=27 // pred_region
          %192 = dma.done %s185, 128
        $region36: #{tpu_custom_call.1} parent=27 // pred_fallthru
          _
        %s193 = sand.u32 %s44, 1
        %s194 = scalar_lea.sflag [#allocation3], %s193
        %s195 = sand.u32 %s44, 1
        %s196 = smul.addr %s195, 8
        %s197 = scalar_lea.vmem [#allocation2], %s196
        %p198 = pneg %p57
        %p199 = pneg %p54
        %s200 = sand.u32 %s72, 1
        %s201 = scalar_lea.sflag [#allocation6], %s200
        %s202 = sand.u32 %s72, 1
        %s203 = smul.addr %s202, 8
        %s204 = scalar_lea.vmem [#allocation5], %s203
        %p205 = pneg %p85
        %p206 = pneg %p82
        %p207 = pneg %p111
        %p208 = pneg %p108
        %s209 = sand.u32 %s98, 1
        %s210 = scalar_lea.sflag [#allocation4], %s209
        %s211 = sand.u32 %s98, 1
        %s212 = smul.addr %s211, 8
        %s213 = scalar_lea.vmem [#allocation7], %s212
        %s214 = sadd.s32 %s26, %s27
        %s215 = sadd.s32 %s26, %s27
        %p216 = scmp.eq.s32.totalorder %s27, 0
        // Predicated region
        $region37: #{tpu_custom_call.1} parent=27 // pred_check
          %p217 = pneg %p216
        $region38: #{tpu_custom_call.1} parent=27 // pred_check_branch
          %219 = sbr.rel (%p217) target = $region40
        $region39: #{tpu_custom_call.1} parent=27 // pred_region
          %220 = vst [vmem:[%s213] sm:$0xff] 0.0
        $region40: #{tpu_custom_call.1} parent=27 // pred_fallthru
          _
        %v221 = vld [vmem:[%s179] sm:$0xff]
        %v222 = vld [vmem:[%s188] sm:$0xff]
        %v223 = vlog2.pop %v221
        %v224 = vmul.f32 %v223, 0.6931472
        %v225 = vmax.f32 %v224, -100.0
        %v226 = vsub.f32 1.0, %v221
        %v227 = vlog2.pop %v226
        %v228 = vmul.f32 %v227, 0.6931472
        %v229 = vmax.f32 %v228, -100.0
        %v230 = vmul.f32 %v222, %v225
        %v231 = vsub.f32 1.0, %v222
        %v232 = vmul.f32 %v231, %v229
        %v233 = vadd.f32 %v230, %v232
        %v234 = vsub.f32 0.0, %v233
        %v235 = vsub.f32 0.0, %v234
        %v236 = vmul.f32 %v235, 1.442695
        %v237 = vpow.pop %v236
        %v238 = vsub.f32 1.0, %v237
        %v239 = vmul.f32 %v238, %v238
        %v240 = vmul.f32 %v239, 0.65
        %v241 = vmul.f32 %v240, %v234
        %v242 = vadd.f32 %v241, 0.0
        %v243 = vld [vmem:[%s213] sm:$0xff]
        %v244 = vadd.f32 %v243, %v242
        %245 = vst [vmem:[%s213] sm:$0xff] %v244
        %s246 = sand.u32 %s98, 1
        %s247 = scalar_lea.sflag [#allocation4], %s246
        %s248 = sand.u32 %s98, 1
        %s249 = smul.addr %s248, 8
        %s250 = scalar_lea.vmem [#allocation7], %s249
        // Predicated region
        $region41: #{tpu_custom_call.1} parent=27 // pred_check
          %p251 = pneg %p108
        $region42: #{tpu_custom_call.1} parent=27 // pred_check_branch
          %253 = sbr.rel (%p251) target = $region44
        $region43: #{tpu_custom_call.1} parent=27 // pred_region
          %s255 = ssub.s32 128, 128
          %256 = vsyncadd %s247, %s255
          %s257 = smul.addr %s26, 128
          %s258 = scalar_lea.hbm %s2, %s257
          %s260 = sshll.u32 %s250, 4
          %s261 = int_to_ptr.vmem [resolvable:$true] %s260
          %263 = dma.vmem_to_hbm [thread:$0]  %s261, 128, %s258, %s247
        $region44: #{tpu_custom_call.1} parent=27 // pred_fallthru
          _
      $region28: #{tpu_custom_call.1} parent=5 // pred_fallthru
        _
      %p264 = scmp.le.s32.totalorder 2, %s17
      // Predicated region
      $region45: #{tpu_custom_call.1} parent=5 // pred_check
        %p265 = pneg %p264
      $region46: #{tpu_custom_call.1} parent=5 // pred_check_branch
        %267 = sbr.rel (%p265) target = $region48
      $region47: #{tpu_custom_call.1} parent=5 // pred_region
        %s268 = ssub.s32 %s17, 2
        // Predicated region
        $region49: #{tpu_custom_call.1} parent=47 // pred_check
          %p269 = pneg %p114
        $region50: #{tpu_custom_call.1} parent=47 // pred_check_branch
          %271 = sbr.rel (%p269) target = $region52
        $region51: #{tpu_custom_call.1} parent=47 // pred_region
          %s272 = sand.u32 %s99, 1
          %s273 = scalar_lea.sflag [#allocation4], %s272
          %s274 = sand.u32 %s99, 1
          %s275 = smul.addr %s274, 8
          %s276 = scalar_lea.vmem [#allocation7], %s275
          %277 = dma.done %s273, 128
        $region52: #{tpu_custom_call.1} parent=47 // pred_fallthru
          _
      $region48: #{tpu_custom_call.1} parent=5 // pred_fallthru
        _
    $region6: #{tpu_custom_call.1} parent=1 // loop_footer
      %s21 = sadd.s32 1, %s17
    $region7: #{tpu_custom_call.1} parent=1 // loop_footer_branch
      %16 = sbr.rel target = $region3
    $region8: #{tpu_custom_call.1} parent=1 // loop_exit
      _
    %278 = vsyncpa [#allocation3], 1
    %s279 = scalar_lea.sflag [#allocation3], 1
    %280 = vsyncpa %s279, 1
    %281 = vsyncpa [#allocation6], 1
    %s282 = scalar_lea.sflag [#allocation6], 1
    %283 = vsyncpa %s282, 1
    %284 = vsyncpa [#allocation4], 1
    %s285 = scalar_lea.sflag [#allocation4], 1
    %286 = vsyncpa %s285, 1

</llo_original>
